<compile_context>
chip_gen: v5e
topology: v5e:2x2
jax: 0.10.0
libtpu: 0.0.40
codegen_flags: <defaults>
</compile_context>

<pallas_src>
import math

import jax
import jax.numpy as jnp
from jax import lax
from jax.experimental import pallas as pl
from jax.experimental.pallas import tpu as pltpu

_LANE = 128


def _round_up(x, m):
    return (x + m - 1) // m * m


def _mlp_softplus_kernel(x_ref, w_ref, b_ref, out_ref):
    """Deep MLP: (Linear+ReLU) x (n-1) -> Linear+Softplus.

    x_ref  : (1, in_dim)                  f32
    w_ref  : (n_layers, K_PLANE, N_PLANE) bf16  (layer i weight in [i, :k_i, :],
                                                 zero-padded elsewhere)
    b_ref  : (n_layers, N_PLANE)          f32   (layer i bias in row i)
    out_ref: (1, N_PLANE)                 f32   (real outputs in lanes [:out_dim])
    """
    n_layers = w_ref.shape[0]
    h = x_ref[...].astype(jnp.float32)          # (1, in_dim)

    for i in range(n_layers):                   # static unroll
        kw = h.shape[-1]                        # in_dim for layer 0, N_PLANE after
        w_full = w_ref[i]                       # (K_PLANE, N_PLANE) bf16
        w = w_full if kw == w_full.shape[0] else w_full[:kw, :]
        z = jnp.dot(h.astype(jnp.bfloat16), w,
                    preferred_element_type=jnp.float32)
        z = z + b_ref[i:i + 1, :]               # (1, N_PLANE) f32
        if i < n_layers - 1:
            h = jnp.maximum(z, 0.0)             # ReLU (f32, VPU)
        else:
            # Softplus matching torch.nn.Softplus (beta=1, threshold=20), f32.
            h = jnp.where(z > 20.0, z,
                          jnp.log1p(jnp.exp(jnp.minimum(z, 20.0))))
    out_ref[...] = h


def mlp_pallas(x_row, w_slab, b_slab, out_dim):
    """x_row: (in_dim,) flattened data vector. Returns (out_dim,) f32 > 0."""
    x = x_row[None, :].astype(jnp.float32)      # (1, in_dim) -- no padding scatter
    n_plane = w_slab.shape[-1]

    out = pl.pallas_call(
        _mlp_softplus_kernel,
        out_shape=jax.ShapeDtypeStruct((1, n_plane), jnp.float32),
        in_specs=[pl.BlockSpec(memory_space=pltpu.MemorySpace.VMEM)] * 3,
        out_specs=pl.BlockSpec(memory_space=pltpu.MemorySpace.VMEM),
    )(x, w_slab, b_slab)
    return out[0, :out_dim]


def init_params(key, in_dim, h_dim, out_dim, n_layers):
    """nn.Linear-style U(-1/sqrt(fan_in), +1/sqrt(fan_in)) init, packed into
    a single lane-dense bf16 weight slab and a single f32 bias slab."""
    dims = [in_dim] + [h_dim] * (n_layers - 1) + [out_dim]
    n_plane = max(_round_up(d, _LANE) for d in dims[1:])
    # Plane K must cover both the raw input width and the padded hidden width.
    k_plane = max(_round_up(in_dim, 16), n_plane)   # 16 = bf16 sublane pack

    w_slab = jnp.zeros((n_layers, k_plane, n_plane), jnp.bfloat16)
    b_slab = jnp.zeros((n_layers, n_plane), jnp.float32)
    for i in range(n_layers):
        fan_in, fan_out = dims[i], dims[i + 1]
        key, kw, kb = jax.random.split(key, 3)
        bound = 1.0 / math.sqrt(fan_in)
        w = jax.random.uniform(kw, (fan_in, fan_out), jnp.float32, -bound, bound)
        b = jax.random.uniform(kb, (fan_out,), jnp.float32, -bound, bound)
        w_slab = w_slab.at[i, :fan_in, :fan_out].set(w.astype(jnp.bfloat16))
        b_slab = b_slab.at[i, :fan_out].set(b)
    return w_slab, b_slab


def dirichlet_kl(alpha, beta):
    """KL( Dirichlet(alpha) || Dirichlet(beta) ), matching torch.distributions."""
    a0 = jnp.sum(alpha)
    b0 = jnp.sum(beta)
    t1 = lax.lgamma(a0) - lax.lgamma(b0)
    t2 = jnp.sum(lax.lgamma(alpha) - lax.lgamma(beta))
    t3 = jnp.sum((alpha - beta) * (lax.digamma(alpha) - lax.digamma(a0)))
    return t1 - t2 + t3


def ancestor_deep_dir_encoder_forward(data, sample_size, w_slab, b_slab, pi,
                                      out_dim, key):
    """Mirrors AncestorDeepDirEncoder.forward(data, sample_size)."""
    # data.squeeze(0).flatten(0) -> 1-D vector of length in_dim
    x_row = jnp.reshape(jnp.squeeze(data, axis=0), (-1,)).astype(jnp.float32)

    # a_logit = self.net(data): deep MLP + Softplus, inside the Pallas kernel.
    a_logit = mlp_pallas(x_row, w_slab, b_slab, out_dim)     # (out_dim,)
    # Numerical guard only: softplus > 0 mathematically, but protect the
    # Dirichlet/KL against f32 underflow to exactly 0.
    a_logit = jnp.maximum(a_logit, 1e-6)

    # samples = Dirichlet(a_logit).rsample([sample_size])
    # TODO(synk): gamma rejection sampling (Dirichlet rsample) has no clean
    # Pallas equivalent; done with jax.random.dirichlet in plain JAX.
    samples = jax.random.dirichlet(key, a_logit, shape=(sample_size,))

    # a_kl = KL( Dirichlet(a_logit) || Dirichlet(pi) )  -- scalar glue in JAX.
    a_kl = dirichlet_kl(a_logit, pi)

    return samples, a_kl


if __name__ == "__main__":
    # Small shapes consistent with the module: data flattens to in_dim features,
    # prior is a 4-vector => out_dim = 4.
    in_dim, h_dim, out_dim, n_layers = 64, 32, 4, 3
    sample_size = 8

    key = jax.random.PRNGKey(0)
    k_data, k_params, k_sample = jax.random.split(key, 3)

    # data: (1, 16, 4) -> squeeze(0).flatten(0) -> (64,) == in_dim
    data = jax.random.uniform(k_data, (1, 16, 4), dtype=jnp.float32)
    w_slab, b_slab = init_params(k_params, in_dim, h_dim, out_dim, n_layers)
    pi = jnp.ones((out_dim,), jnp.float32)   # ancestor_prior_hp = torch.ones(4)

    samples, a_kl = ancestor_deep_dir_encoder_forward(
        data, sample_size, w_slab, b_slab, pi, out_dim, k_sample
    )
    jax.block_until_ready((samples, a_kl))

    assert samples.shape == (sample_size, out_dim)
    assert a_kl.shape == ()
    assert bool(jnp.all(jnp.isfinite(samples))) and bool(jnp.isfinite(a_kl))
    print("KERNEL_OK")
</pallas_src>

<mosaic_0001>
module attributes {stable_mosaic.version = 11 : i64} {
  func.func @_mlp_softplus_kernel(%arg0: memref<1x64xf32, #tpu.memory_space<vmem>>, %arg1: memref<3x128x128xbf16, #tpu.memory_space<vmem>>, %arg2: memref<3x128xf32, #tpu.memory_space<vmem>>, %arg3: memref<1x128xf32, #tpu.memory_space<vmem>>) attributes {dimension_semantics = [], scalar_prefetch = 0 : i64, scratch_operands = 0 : i64, tpu.core_type = #tpu.core_type<tc>} {
    %c0 = arith.constant 0 : index
    %c0_0 = arith.constant 0 : index
    %0 = vector.load %arg0[%c0, %c0_0] : memref<1x64xf32, #tpu.memory_space<vmem>>, vector<1x64xf32>
    %c0_1 = arith.constant 0 : index
    %c0_2 = arith.constant 0 : index
    %c0_3 = arith.constant 0 : index
    %1 = vector.load %arg1[%c0_1, %c0_2, %c0_3] : memref<3x128x128xbf16, #tpu.memory_space<vmem>>, vector<1x128x128xbf16>
    %2 = vector.shape_cast %1 : vector<1x128x128xbf16> to vector<128x128xbf16>
    %3 = vector.extract_strided_slice %2 {offsets = [0, 0], sizes = [64, 128], strides = [1, 1]} : vector<128x128xbf16> to vector<64x128xbf16>
    %4 = arith.truncf %0 : vector<1x64xf32> to vector<1x64xbf16>
    %cst = arith.constant dense<0.000000e+00> : vector<1x128xf32>
    %5 = tpu.matmul %4, %3, %cst {dimension_numbers = #tpu.dot_dimension_numbers<[1], [0], [0], [1], [0, 0, 1, 1], [], []>} : vector<1x64xbf16>, vector<64x128xbf16>, vector<1x128xf32> -> vector<1x128xf32>
    %c0_4 = arith.constant 0 : index
    %c0_5 = arith.constant 0 : index
    %6 = vector.load %arg2[%c0_4, %c0_5] : memref<3x128xf32, #tpu.memory_space<vmem>>, vector<1x128xf32>
    %7 = arith.addf %5, %6 : vector<1x128xf32>
    %cst_6 = arith.constant 0.000000e+00 : f32
    %8 = vector.broadcast %cst_6 : f32 to vector<1x128xf32>
    %9 = arith.maximumf %7, %8 : vector<1x128xf32>
    %c1 = arith.constant 1 : index
    %c0_7 = arith.constant 0 : index
    %c0_8 = arith.constant 0 : index
    %10 = vector.load %arg1[%c1, %c0_7, %c0_8] : memref<3x128x128xbf16, #tpu.memory_space<vmem>>, vector<1x128x128xbf16>
    %11 = vector.shape_cast %10 : vector<1x128x128xbf16> to vector<128x128xbf16>
    %12 = arith.truncf %9 : vector<1x128xf32> to vector<1x128xbf16>
    %cst_9 = arith.constant dense<0.000000e+00> : vector<1x128xf32>
    %13 = tpu.matmul %12, %11, %cst_9 {dimension_numbers = #tpu.dot_dimension_numbers<[1], [0], [0], [1], [0, 0, 1, 1], [], []>} : vector<1x128xbf16>, vector<128x128xbf16>, vector<1x128xf32> -> vector<1x128xf32>
    %c1_10 = arith.constant 1 : index
    %c0_11 = arith.constant 0 : index
    %14 = vector.load %arg2[%c1_10, %c0_11] : memref<3x128xf32, #tpu.memory_space<vmem>>, vector<1x128xf32>
    %15 = arith.addf %13, %14 : vector<1x128xf32>
    %cst_12 = arith.constant 0.000000e+00 : f32
    %16 = vector.broadcast %cst_12 : f32 to vector<1x128xf32>
    %17 = arith.maximumf %15, %16 : vector<1x128xf32>
    %c2 = arith.constant 2 : index
    %c0_13 = arith.constant 0 : index
    %c0_14 = arith.constant 0 : index
    %18 = vector.load %arg1[%c2, %c0_13, %c0_14] : memref<3x128x128xbf16, #tpu.memory_space<vmem>>, vector<1x128x128xbf16>
    %19 = vector.shape_cast %18 : vector<1x128x128xbf16> to vector<128x128xbf16>
    %20 = arith.truncf %17 : vector<1x128xf32> to vector<1x128xbf16>
    %cst_15 = arith.constant dense<0.000000e+00> : vector<1x128xf32>
    %21 = tpu.matmul %20, %19, %cst_15 {dimension_numbers = #tpu.dot_dimension_numbers<[1], [0], [0], [1], [0, 0, 1, 1], [], []>} : vector<1x128xbf16>, vector<128x128xbf16>, vector<1x128xf32> -> vector<1x128xf32>
    %c2_16 = arith.constant 2 : index
    %c0_17 = arith.constant 0 : index
    %22 = vector.load %arg2[%c2_16, %c0_17] : memref<3x128xf32, #tpu.memory_space<vmem>>, vector<1x128xf32>
    %23 = arith.addf %21, %22 : vector<1x128xf32>
    %cst_18 = arith.constant 2.000000e+01 : f32
    %24 = vector.broadcast %cst_18 : f32 to vector<1x128xf32>
    %25 = arith.cmpf ogt, %23, %24 : vector<1x128xf32>
    %cst_19 = arith.constant 2.000000e+01 : f32
    %26 = vector.broadcast %cst_19 : f32 to vector<1x128xf32>
    %27 = arith.minimumf %23, %26 : vector<1x128xf32>
    %28 = math.exp %27 : vector<1x128xf32>
    %29 = math.log1p %28 : vector<1x128xf32>
    %30 = arith.select %25, %23, %29 : vector<1x128xi1>, vector<1x128xf32>
    %c0_20 = arith.constant 0 : index
    %c0_21 = arith.constant 0 : index
    %31 = vector.load %arg3[%c0_20, %c0_21] : memref<1x128xf32, #tpu.memory_space<vmem>>, vector<1x128xf32>
    tpu.vector_store %arg3[%c0_20, %c0_21], %30 {strides = array<i32>} : memref<1x128xf32, #tpu.memory_space<vmem>>, vector<1x128xf32>,
    return
  }
}

</mosaic_0001>

<llo_original>
// kernel: tpu_custom_call.1
$region0: #{tpu_custom_call.1}
  #allocation0 [shape = 'u32[]', space=smem, size = 0x4, offset = 0x4, fixed_abs, tag = 'smem constant byte address 0x4 - core index']
  #allocation1 [shape = 'u32[72,128]{1,0:T(1,128)}', space=vmem, size = 0x9000, scoped, tag = 'internal scratch']
  %s0 = inlined_call_operand.hbm [shape: f32[1,64], index: 0, kind: input, shape index: {}]
  %s1 = inlined_call_operand.hbm [shape: bf16[3,128,128], index: 1, kind: input, shape index: {}]
  %s2 = inlined_call_operand.hbm [shape: f32[3,128], index: 2, kind: input, shape index: {}]
  %s3 = inlined_call_operand.hbm [shape: f32[1,128], index: 3, kind: output, shape index: {}]
  %s4 = sld [smem:[#allocation0]]
  $region34: #{tpu_custom_call.1} parent=0
    _
  %s6 = ssub.s32 1, %s4
  %s7 = scalar_select 0, %s6, %s4
  $region1: #{tpu_custom_call.1} parent=0
    #allocation2 [shape = 'u8[512]{0}', space=vmem, size = 0x400, scoped, tag = 'input window, operand 0, single buffered']
    #allocation3 [shape = 's32[1]{0}', space=sflag, size = 0x4, scoped, tag = 'scoped memory for tpu_custom_call.1']
    #allocation4 [shape = 's32[1]{0}', space=sflag, size = 0x4, scoped, tag = 'scoped memory for tpu_custom_call.1']
    #allocation5 [shape = 'u8[98304]{0}', space=vmem, size = 0x18000, scoped, tag = 'input window, operand 1, single buffered']
    #allocation6 [shape = 's32[1]{0}', space=sflag, size = 0x4, scoped, tag = 'scoped memory for tpu_custom_call.1']
    #allocation7 [shape = 'u8[2048]{0}', space=vmem, size = 0x800, scoped, tag = 'input window, operand 2, single buffered']
    #allocation8 [shape = 'u8[512]{0}', space=vmem, size = 0x400, scoped, tag = 'output window, operand 0, single buffered']
    %8 = vsyncpa [#allocation3], 0
    %9 = vsyncpa [#allocation6], 0
    %10 = vsyncpa [#allocation4], 0
    // Predicated region
    $region2: #{tpu_custom_call.1} parent=1 // pred_check
      _
    $region3: #{tpu_custom_call.1} parent=1 // pred_check_branch
      %12 = sbr.rel (0) target = $region5
    $region4: #{tpu_custom_call.1} parent=1 // pred_region
      %14 = vsyncadd [#allocation3], 0
      %s16 = sshll.u32 %s0, 4
      %s17 = int_to_ptr.hbm [resolvable:$true] %s16
      %s18 = sshll.u32 [#allocation2], 4
      %s19 = int_to_ptr.vmem [resolvable:$true] %s18
      %21 = dma.hbm_to_vmem [thread:$0]  %s17, 16, %s19, [#allocation3]
    $region5: #{tpu_custom_call.1} parent=1 // pred_fallthru
      _
    // Predicated region
    $region6: #{tpu_custom_call.1} parent=1 // pred_check
      _
    $region7: #{tpu_custom_call.1} parent=1 // pred_check_branch
      %23 = sbr.rel (0) target = $region9
    $region8: #{tpu_custom_call.1} parent=1 // pred_region
      %25 = vsyncadd [#allocation6], 0
      %s26 = sshll.u32 %s1, 4
      %s27 = int_to_ptr.hbm [resolvable:$true] %s26
      %s28 = sshll.u32 [#allocation5], 4
      %s29 = int_to_ptr.vmem [resolvable:$true] %s28
      %34 = dma.hbm_to_vmem [thread:$0]  %s27, 3072, %s29, [#allocation6], 64, 64, 4
    $region9: #{tpu_custom_call.1} parent=1 // pred_fallthru
      _
    // Predicated region
    $region10: #{tpu_custom_call.1} parent=1 // pred_check
      _
    $region11: #{tpu_custom_call.1} parent=1 // pred_check_branch
      %36 = sbr.rel (0) target = $region13
    $region12: #{tpu_custom_call.1} parent=1 // pred_region
      %38 = vsyncadd [#allocation6], 0
      %s40 = sshll.u32 %s2, 4
      %s41 = int_to_ptr.hbm [resolvable:$true] %s40
      %s42 = sshll.u32 [#allocation7], 4
      %s43 = int_to_ptr.vmem [resolvable:$true] %s42
      %45 = dma.hbm_to_vmem [thread:$0]  %s41, 64, %s43, [#allocation6]
    $region13: #{tpu_custom_call.1} parent=1 // pred_fallthru
      _
    // Predicated region
    $region14: #{tpu_custom_call.1} parent=1 // pred_check
      _
    $region15: #{tpu_custom_call.1} parent=1 // pred_check_branch
      %47 = sbr.rel (0) target = $region17
    $region16: #{tpu_custom_call.1} parent=1 // pred_region
      %49 = dma.done [#allocation3], 16
    $region17: #{tpu_custom_call.1} parent=1 // pred_fallthru
      _
    // Predicated region
    $region18: #{tpu_custom_call.1} parent=1 // pred_check
      _
    $region19: #{tpu_custom_call.1} parent=1 // pred_check_branch
      %51 = sbr.rel (0) target = $region21
    $region20: #{tpu_custom_call.1} parent=1 // pred_region
      %53 = dma.done [#allocation6], 3072
    $region21: #{tpu_custom_call.1} parent=1 // pred_fallthru
      _
    // Predicated region
    $region22: #{tpu_custom_call.1} parent=1 // pred_check
      _
    $region23: #{tpu_custom_call.1} parent=1 // pred_check_branch
      %55 = sbr.rel (0) target = $region25
    $region24: #{tpu_custom_call.1} parent=1 // pred_region
      %57 = dma.done [#allocation6], 64
    $region25: #{tpu_custom_call.1} parent=1 // pred_fallthru
      _
    %v59 = vld [vmem:[#allocation2] sm:$0x1]
    %v60 = vld [vmem:[#allocation5] sm:$0xf]
    %v61 = vld [vmem:[#allocation5 + $0x4] sm:$0xf]
    %v62 = vld [vmem:[#allocation5 + $0x8] sm:$0xf]
    %v63 = vld [vmem:[#allocation5 + $0xc] sm:$0xf]
    %v64 = vld [vmem:[#allocation5 + $0x10] sm:$0xf]
    %v65 = vld [vmem:[#allocation5 + $0x14] sm:$0xf]
    %v66 = vld [vmem:[#allocation5 + $0x18] sm:$0xf]
    %v67 = vld [vmem:[#allocation5 + $0x1c] sm:$0xf]
    %v68 = vpack.c.bf16 %v59, %v59
    %v69 = vld [vmem:[#allocation7] sm:$0x1]
    %v78 = vunpack.c.l.b16 %v60
    %v79 = vunpack.c.l.b16 %v61
    %v80 = vunpack.c.l.b16 %v62
    %v81 = vunpack.c.l.b16 %v63
    %v82 = vunpack.c.l.b16 %v64
    %v83 = vunpack.c.l.b16 %v65
    %v84 = vunpack.c.l.b16 %v66
    %v85 = vunpack.c.l.b16 %v67
    %v86 = vpack.c.b16 %v79, %v78
    %v87 = vpack.c.b16 %v81, %v80
    %v88 = vpack.c.b16 %v83, %v82
    %v89 = vpack.c.b16 %v85, %v84
    %vm94 = vcmask 523264
    %v96 = vsel %vm94, %v68, 0
    %98 = vmatpush.bf16.msra.mxu0 0
    %99 = vmatpush.bf16.msra.mxu0 0
    %100 = vmatpush.bf16.msra.mxu0 0
    %101 = vmatpush.bf16.msra.mxu0 0
    %102 = vmatpush.bf16.msra.mxu0 %v89
    %103 = vmatpush.bf16.msra.mxu0 %v88
    %104 = vmatpush.bf16.msra.mxu0 %v87
    %105 = vmatpush.bf16.msra.mxu0 %v86
    %106 = vmatmul.bf16.gmra.mxu0 %v96
    %v107 = vpop.f32.mrf.mxu0
    %v108 = vadd.f32 %v69, %v107
    %v109 = vpop.f32.mrf.mxu0
    %110 = vdwg.mxu0
    %v111 = vmax.f32 %v108, 0.0
    %s112 = scalar_lea.vmem [#allocation5], 64
    %v113 = vld [vmem:[%s112] sm:$0xf]
    %v114 = vld [vmem:[%s112 + $0x4] sm:$0xf]
    %v115 = vld [vmem:[%s112 + $0x8] sm:$0xf]
    %v116 = vld [vmem:[%s112 + $0xc] sm:$0xf]
    %v117 = vld [vmem:[%s112 + $0x10] sm:$0xf]
    %v118 = vld [vmem:[%s112 + $0x14] sm:$0xf]
    %v119 = vld [vmem:[%s112 + $0x18] sm:$0xf]
    %v120 = vld [vmem:[%s112 + $0x1c] sm:$0xf]
    %v121 = vld [vmem:[%s112 + $0x20] sm:$0xf]
    %v122 = vld [vmem:[%s112 + $0x24] sm:$0xf]
    %v123 = vld [vmem:[%s112 + $0x28] sm:$0xf]
    %v124 = vld [vmem:[%s112 + $0x2c] sm:$0xf]
    %v125 = vld [vmem:[%s112 + $0x30] sm:$0xf]
    %v126 = vld [vmem:[%s112 + $0x34] sm:$0xf]
    %v127 = vld [vmem:[%s112 + $0x38] sm:$0xf]
    %v128 = vld [vmem:[%s112 + $0x3c] sm:$0xf]
    %v129 = vpack.c.bf16 %v111, %v111
    %v130 = vld [vmem:[#allocation7 + $0x1] sm:$0x1]
    %v147 = vunpack.c.l.b16 %v113
    %v148 = vunpack.c.l.b16 %v114
    %v149 = vunpack.c.l.b16 %v115
    %v150 = vunpack.c.l.b16 %v116
    %v151 = vunpack.c.l.b16 %v117
    %v152 = vunpack.c.l.b16 %v118
    %v153 = vunpack.c.l.b16 %v119
    %v154 = vunpack.c.l.b16 %v120
    %v155 = vunpack.c.l.b16 %v121
    %v156 = vunpack.c.l.b16 %v122
    %v157 = vunpack.c.l.b16 %v123
    %v158 = vunpack.c.l.b16 %v124
    %v159 = vunpack.c.l.b16 %v125
    %v160 = vunpack.c.l.b16 %v126
    %v161 = vunpack.c.l.b16 %v127
    %v162 = vunpack.c.l.b16 %v128
    %v163 = vpack.c.b16 %v148, %v147
    %v164 = vpack.c.b16 %v150, %v149
    %v165 = vpack.c.b16 %v152, %v151
    %v166 = vpack.c.b16 %v154, %v153
    %v167 = vpack.c.b16 %v156, %v155
    %v168 = vpack.c.b16 %v158, %v157
    %v169 = vpack.c.b16 %v160, %v159
    %v170 = vpack.c.b16 %v162, %v161
    %179 = vmatpush.bf16.msra.mxu0 %v170
    %180 = vmatpush.bf16.msra.mxu0 %v169
    %181 = vmatpush.bf16.msra.mxu0 %v168
    %182 = vmatpush.bf16.msra.mxu0 %v167
    %183 = vmatpush.bf16.msra.mxu0 %v166
    %184 = vmatpush.bf16.msra.mxu0 %v165
    %185 = vmatpush.bf16.msra.mxu0 %v164
    %186 = vmatpush.bf16.msra.mxu0 %v163
    %187 = vmatmul.bf16.gmra.mxu0 %v129
    %v188 = vpop.f32.mrf.mxu0
    %v189 = vadd.f32 %v130, %v188
    %v190 = vpop.f32.mrf.mxu0
    %191 = vdwg.mxu0
    %v192 = vmax.f32 %v189, 0.0
    %s193 = scalar_lea.vmem [#allocation5], 128
    %v194 = vld [vmem:[%s193] sm:$0xf]
    %v195 = vld [vmem:[%s193 + $0x4] sm:$0xf]
    %v196 = vld [vmem:[%s193 + $0x8] sm:$0xf]
    %v197 = vld [vmem:[%s193 + $0xc] sm:$0xf]
    %v198 = vld [vmem:[%s193 + $0x10] sm:$0xf]
    %v199 = vld [vmem:[%s193 + $0x14] sm:$0xf]
    %v200 = vld [vmem:[%s193 + $0x18] sm:$0xf]
    %v201 = vld [vmem:[%s193 + $0x1c] sm:$0xf]
    %v202 = vld [vmem:[%s193 + $0x20] sm:$0xf]
    %v203 = vld [vmem:[%s193 + $0x24] sm:$0xf]
    %v204 = vld [vmem:[%s193 + $0x28] sm:$0xf]
    %v205 = vld [vmem:[%s193 + $0x2c] sm:$0xf]
    %v206 = vld [vmem:[%s193 + $0x30] sm:$0xf]
    %v207 = vld [vmem:[%s193 + $0x34] sm:$0xf]
    %v208 = vld [vmem:[%s193 + $0x38] sm:$0xf]
    %v209 = vld [vmem:[%s193 + $0x3c] sm:$0xf]
    %v210 = vpack.c.bf16 %v192, %v192
    %v211 = vld [vmem:[#allocation7 + $0x2] sm:$0x1]
    %v228 = vunpack.c.l.b16 %v194
    %v229 = vunpack.c.l.b16 %v195
    %v230 = vunpack.c.l.b16 %v196
    %v231 = vunpack.c.l.b16 %v197
    %v232 = vunpack.c.l.b16 %v198
    %v233 = vunpack.c.l.b16 %v199
    %v234 = vunpack.c.l.b16 %v200
    %v235 = vunpack.c.l.b16 %v201
    %v236 = vunpack.c.l.b16 %v202
    %v237 = vunpack.c.l.b16 %v203
    %v238 = vunpack.c.l.b16 %v204
    %v239 = vunpack.c.l.b16 %v205
    %v240 = vunpack.c.l.b16 %v206
    %v241 = vunpack.c.l.b16 %v207
    %v242 = vunpack.c.l.b16 %v208
    %v243 = vunpack.c.l.b16 %v209
    %v244 = vpack.c.b16 %v229, %v228
    %v245 = vpack.c.b16 %v231, %v230
    %v246 = vpack.c.b16 %v233, %v232
    %v247 = vpack.c.b16 %v235, %v234
    %v248 = vpack.c.b16 %v237, %v236
    %v249 = vpack.c.b16 %v239, %v238
    %v250 = vpack.c.b16 %v241, %v240
    %v251 = vpack.c.b16 %v243, %v242
    %260 = vmatpush.bf16.msra.mxu0 %v251
    %261 = vmatpush.bf16.msra.mxu0 %v250
    %262 = vmatpush.bf16.msra.mxu0 %v249
    %263 = vmatpush.bf16.msra.mxu0 %v248
    %264 = vmatpush.bf16.msra.mxu0 %v247
    %265 = vmatpush.bf16.msra.mxu0 %v246
    %266 = vmatpush.bf16.msra.mxu0 %v245
    %267 = vmatpush.bf16.msra.mxu0 %v244
    %268 = vmatmul.bf16.gmra.mxu0 %v210
    %v269 = vpop.f32.mrf.mxu0
    %v270 = vadd.f32 %v211, %v269
    %v271 = vpop.f32.mrf.mxu0
    %272 = vdwg.mxu0
    %vm273 = vcmp.gt.f32.partialorder %v270, 20.0
    %v274 = vmin.f32 %v270, 20.0
    %v275 = vmul.f32 %v274, 1.442695
    %v276 = vpow.pop %v275
    %v277 = vadd.f32 %v276, 1.0
    %v278 = vlog2.pop %v277
    %v279 = vmul.f32 %v278, 0.6931472
    %v280 = vmul.f32 -0.5, %v276
    %v281 = vadd.f32 %v280, 1.0
    %v282 = vmul.f32 %v281, %v276
    %v283 = vand.u32 2147483647, %v276
    %vm284 = vcmp.lt.f32.partialorder %v283, 0.0004427343
    %v285 = vsel %vm284, %v282, %v279
    %v286 = vsel %vm273, %v270, %v285
    %287 = vst [vmem:[#allocation8] sm:$0x1] %v286
    // Predicated region
    $region26: #{tpu_custom_call.1} parent=1 // pred_check
      _
    $region27: #{tpu_custom_call.1} parent=1 // pred_check_branch
      %289 = sbr.rel (0) target = $region29
    $region28: #{tpu_custom_call.1} parent=1 // pred_region
      %291 = vsyncadd [#allocation4], 0
      %s293 = sshll.u32 [#allocation8], 4
      %s294 = int_to_ptr.vmem [resolvable:$true] %s293
      %s295 = sshll.u32 %s3, 4
      %s296 = int_to_ptr.hbm [resolvable:$true] %s295
      %298 = dma.vmem_to_hbm [thread:$0]  %s294, 16, %s296, [#allocation4]
    $region29: #{tpu_custom_call.1} parent=1 // pred_fallthru
      _
    // Predicated region
    $region30: #{tpu_custom_call.1} parent=1 // pred_check
      _
    $region31: #{tpu_custom_call.1} parent=1 // pred_check_branch
      %300 = sbr.rel (0) target = $region33
    $region32: #{tpu_custom_call.1} parent=1 // pred_region
      %302 = dma.done [#allocation4], 16
    $region33: #{tpu_custom_call.1} parent=1 // pred_fallthru
      _
    %303 = vsyncpa [#allocation3], 1
    %304 = vsyncpa [#allocation6], 1
    %305 = vsyncpa [#allocation4], 1

</llo_original>
